<compile_context>
chip_gen: v6e
topology: v6e:2x2x1
jax: 0.10.0
libtpu: 0.0.40
codegen_flags: <defaults>
</compile_context>

<pallas_src>
import jax
import jax.numpy as jnp
from jax import lax
from jax.experimental import pallas as pl
from jax.experimental.pallas import tpu as pltpu

LEAKY = 0.2
LN_EPS = 1e-5


def _leaky_relu(x):
    return jnp.where(x > 0, x, LEAKY * x)


def _round_up(x, m):
    return (x + m - 1) // m * m


def _make_kernel(vocab_size, use_onehot_matmul):
    def kernel(ids_ref,                      # (tb, 1) int32 (VMEM, batch-tiled)
               w1_ref, b1_ref,               # (V, H0) bf16, (1, H0) f32
               w2_ref, b2_ref,               # (H0, H1) bf16, (1, H1) f32
               g2_ref, beta2_ref,            # (1, H1) f32 LayerNorm affine
               w3_ref, b3_ref,               # (H1, OUT_PAD) bf16, (1, OUT_PAD) f32
               o_ref):                       # (tb, OUT_PAD) f32
        tb = o_ref.shape[0]
        ids_col = ids_ref[...]               # (tb, 1) int32

        # ---- Layer 1: one_hot(x) @ W1 ---------------------------------------
        if use_onehot_matmul:
            # Small vocab: build the one-hot in vregs and run one MXU matmul
            # per tile (fully pipelined; no serialized per-row copies).
            onehot = (lax.broadcasted_iota(jnp.int32, (tb, vocab_size), 1)
                      == ids_col).astype(w1_ref.dtype)
            emb = jnp.dot(onehot, w1_ref[...],
                          preferred_element_type=jnp.float32)
        else:
            # Larger vocab: vectorized row gather of the VMEM-resident table.
            # TODO(synk): for very large vocab keep W1 in HBM (pl.ANY) and
            # DMA-gather only the tb indexed rows into a double-buffered
            # scratch, prefetching tile i+1's rows while computing tile i.
            emb = jnp.take(w1_ref[...], ids_col[:, 0], axis=0
                           ).astype(jnp.float32)

        h = _leaky_relu(emb + b1_ref[...])

        # ---- Layer 2: Linear (bf16 MXU, f32 acc) + LayerNorm + LeakyReLU ----
        h = jnp.dot(h.astype(w2_ref.dtype), w2_ref[...],
                    preferred_element_type=jnp.float32) + b2_ref[...]
        mean = jnp.mean(h, axis=-1, keepdims=True)
        c = h - mean
        var = jnp.mean(c * c, axis=-1, keepdims=True)   # >= 0 by construction
        h = c * lax.rsqrt(var + LN_EPS)
        h = _leaky_relu(h * g2_ref[...] + beta2_ref[...])

        # ---- Layer 3: output Linear (lane-padded -> unmasked dense store) ---
        out = jnp.dot(h.astype(w3_ref.dtype), w3_ref[...],
                      preferred_element_type=jnp.float32) + b3_ref[...]
        o_ref[...] = out.astype(o_ref.dtype)

    return kernel


def mlp_onehot_forward(ids, params, output_dim, *, block_b=256,
                       matmul_dtype=jnp.bfloat16, onehot_vocab_max=512):
    """ids: (batch,) integer token ids. Returns (batch, output_dim) float32."""
    w1, b1, w2, b2, g2, beta2, w3, b3 = params
    V, H0 = w1.shape
    H1 = w2.shape[1]
    B = ids.shape[0]

    # Lane-dense output: pad the feature dim to a multiple of 128 (padded
    # columns are exact zeros), slice back below.
    out_pad = _round_up(output_dim, 128)
    # Batch tile: multiple of 8 (sublane), up to block_b.
    tb = min(block_b, _round_up(B, 8))
    b_pad = _round_up(B, tb)
    num_tiles = b_pad // tb

    # Torch F.one_hot raises on OOB/negative ids; clamp so the kernel's
    # behavior stays defined (valid ids are unchanged).
    ids_p = jnp.clip(ids.astype(jnp.int32), 0, V - 1)
    ids_p = jnp.pad(ids_p, (0, b_pad - B)).reshape(b_pad, 1)

    # bf16 weights for the MXU layers (including W1); biases / LN params f32.
    w1c = w1.astype(matmul_dtype)
    w2c = w2.astype(matmul_dtype)
    w3c = jnp.pad(w3, ((0, 0), (0, out_pad - output_dim))).astype(matmul_dtype)
    b3c = jnp.pad(b3, ((0, 0), (0, out_pad - output_dim)))

    kernel = _make_kernel(V, use_onehot_matmul=(V <= onehot_vocab_max))

    # With only 1-2 tiles the kernel is weight-DMA bound; megacore sharding
    # would double weight traffic for little compute win, so keep it serial.
    dim_sem = ("parallel",) if num_tiles >= 4 else ("arbitrary",)

    # Explicit scoped-VMEM budget: resident weights + pipelined ids/out tiles
    # + activation temporaries, capped at 56 MiB (safe on v7x's 64 MiB/TC).
    weight_vmem = ((w1c.size + w2c.size + w3c.size) * 2
                   + (b1.size + b2.size + g2.size + beta2.size + b3c.size) * 4)
    io_vmem = 2 * tb * (4 + out_pad * 4)
    act_vmem = 4 * tb * (V + 2 * H0 + 2 * H1 + out_pad) * 4
    vmem_limit = int(min(max(2 * weight_vmem + io_vmem + act_vmem + (2 << 20),
                             32 << 20), 56 << 20))

    flops = int(2 * b_pad * (V * H0 + H0 * H1 + H1 * out_pad) + 10 * b_pad * H1)
    bytes_accessed = int(ids_p.size * 4
                         + (w1c.size + w2c.size + w3c.size) * 2
                         + (b1.size + b2.size + g2.size + beta2.size
                            + b3c.size) * 4
                         + b_pad * out_pad * 4)

    const = lambda i: (0, 0)

    def build(weight_pipeline_mode):
        wspec = lambda shape: pl.BlockSpec(shape, const,
                                           pipeline_mode=weight_pipeline_mode)
        return pl.pallas_call(
            kernel,
            out_shape=jax.ShapeDtypeStruct((b_pad, out_pad), jnp.float32),
            grid_spec=pltpu.PrefetchScalarGridSpec(
                num_scalar_prefetch=0,
                grid=(num_tiles,),
                in_specs=[
                    pl.BlockSpec((tb, 1), lambda i: (i, 0)),   # ids (batch tile)
                    wspec((V, H0)),         # w1 (bf16, resident)
                    wspec((1, H0)),         # b1
                    wspec((H0, H1)),        # w2 (bf16)
                    wspec((1, H1)),         # b2
                    wspec((1, H1)),         # LayerNorm gamma
                    wspec((1, H1)),         # LayerNorm beta
                    wspec((H1, out_pad)),   # w3 (bf16, lane-padded)
                    wspec((1, out_pad)),    # b3 (lane-padded)
                ],
                out_specs=pl.BlockSpec((tb, out_pad), lambda i: (i, 0)),
            ),
            compiler_params=pltpu.CompilerParams(
                dimension_semantics=dim_sem,
                vmem_limit_bytes=vmem_limit),
            cost_estimate=pl.CostEstimate(flops=flops, transcendentals=b_pad,
                                          bytes_accessed=bytes_accessed),
        )

    args = (ids_p, w1c, b1, w2c, b2, g2, beta2, w3c, b3c)
    try:
        # Grid-invariant weights only need a single VMEM buffer.
        out = build(pl.Buffered(1))(*args)
    except Exception:
        # Graceful fallback if this jax build rejects single-buffering for
        # grid-pipelined operands; semantics are identical.
        out = build(None)(*args)

    return out[:B, :output_dim]


def init_params(key, vocab_size, hidden_dims, output_dim):
    """Deterministic synthetic parameters (shapes match the torch module)."""
    assert len(hidden_dims) == 2, "this script instantiates hidden_dims=[h0, h1]"
    h0, h1 = hidden_dims
    k = jax.random.split(key, 6)
    # weights stored as (in, out); biases as (1, out) for clean broadcasting
    w1 = jax.random.normal(k[0], (vocab_size, h0), jnp.float32) * 0.1
    b1 = jax.random.normal(k[1], (1, h0), jnp.float32) * 0.01
    w2 = jax.random.normal(k[2], (h0, h1), jnp.float32) * 0.1
    b2 = jax.random.normal(k[3], (1, h1), jnp.float32) * 0.01
    g2 = jnp.ones((1, h1), jnp.float32)       # LayerNorm gamma
    beta2 = jnp.zeros((1, h1), jnp.float32)   # LayerNorm beta
    w3 = jax.random.normal(k[4], (h1, output_dim), jnp.float32) * 0.1
    b3 = jax.random.normal(k[5], (1, output_dim), jnp.float32) * 0.01
    return (w1, b1, w2, b2, g2, beta2, w3, b3)


def reference_forward(ids, params, vocab_size):
    """Pure-JAX f32 reference mirroring the torch forward."""
    w1, b1, w2, b2, g2, beta2, w3, b3 = params
    onehot = jax.nn.one_hot(ids, vocab_size, dtype=jnp.float32)
    h = _leaky_relu(onehot @ w1 + b1)
    h = h @ w2 + b2
    mean = jnp.mean(h, axis=-1, keepdims=True)
    var = jnp.mean((h - mean) ** 2, axis=-1, keepdims=True)
    h = (h - mean) / jnp.sqrt(var + LN_EPS) * g2 + beta2
    h = _leaky_relu(h)
    return h @ w3 + b3


if __name__ == "__main__":
    VOCAB = 32
    HIDDEN = [64, 64]
    OUT = 16
    BATCH = 8

    key = jax.random.PRNGKey(0)
    k_ids, k_params = jax.random.split(key)
    ids = jax.random.randint(k_ids, (BATCH,), 0, VOCAB, dtype=jnp.int32)
    params = init_params(k_params, VOCAB, HIDDEN, OUT)

    y = mlp_onehot_forward(ids, params, OUT)
    y = jax.block_until_ready(y)

    y_ref = reference_forward(ids, params, VOCAB)
    assert y.shape == (BATCH, OUT)
    # bf16 weights (f32 accumulation) vs f32 reference -> loose-but-tight tol
    assert jnp.allclose(y, y_ref, atol=5e-2, rtol=5e-2), (
        float(jnp.max(jnp.abs(y - y_ref))))

    print("KERNEL_OK")
</pallas_src>

<mosaic_0001>
module attributes {stable_mosaic.version = 11 : i64} {
  func.func @kernel(%arg0: i32, %arg1: memref<8x1xi32, #tpu.memory_space<vmem>>, %arg2: memref<32x64xbf16, #tpu.memory_space<vmem>>, %arg3: memref<1x64xf32, #tpu.memory_space<vmem>>, %arg4: memref<64x64xbf16, #tpu.memory_space<vmem>>, %arg5: memref<1x64xf32, #tpu.memory_space<vmem>>, %arg6: memref<1x64xf32, #tpu.memory_space<vmem>>, %arg7: memref<1x64xf32, #tpu.memory_space<vmem>>, %arg8: memref<64x128xbf16, #tpu.memory_space<vmem>>, %arg9: memref<1x128xf32, #tpu.memory_space<vmem>>, %arg10: memref<8x128xf32, #tpu.memory_space<vmem>>) attributes {dimension_semantics = [#tpu.dimension_semantics<arbitrary>], iteration_bounds = array<i64: 1>, scalar_prefetch = 0 : i64, scratch_operands = 0 : i64, tpu.core_type = #tpu.core_type<tc>, window_params = [{transform_indices = @transform_0, window_bounds = array<i64: 8, 1>}, {pipeline_mode = #tpu.pipeline_mode<synchronous>, transform_indices = @transform_1, window_bounds = array<i64: 32, 64>}, {pipeline_mode = #tpu.pipeline_mode<synchronous>, transform_indices = @transform_2, window_bounds = array<i64: 1, 64>}, {pipeline_mode = #tpu.pipeline_mode<synchronous>, transform_indices = @transform_3, window_bounds = array<i64: 64, 64>}, {pipeline_mode = #tpu.pipeline_mode<synchronous>, transform_indices = @transform_4, window_bounds = array<i64: 1, 64>}, {pipeline_mode = #tpu.pipeline_mode<synchronous>, transform_indices = @transform_5, window_bounds = array<i64: 1, 64>}, {pipeline_mode = #tpu.pipeline_mode<synchronous>, transform_indices = @transform_6, window_bounds = array<i64: 1, 64>}, {pipeline_mode = #tpu.pipeline_mode<synchronous>, transform_indices = @transform_7, window_bounds = array<i64: 64, 128>}, {pipeline_mode = #tpu.pipeline_mode<synchronous>, transform_indices = @transform_8, window_bounds = array<i64: 1, 128>}, {transform_indices = @transform_9, window_bounds = array<i64: 8, 128>}]} {
    %c0 = arith.constant 0 : index
    %c0_0 = arith.constant 0 : index
    %0 = vector.load %arg1[%c0, %c0_0] : memref<8x1xi32, #tpu.memory_space<vmem>>, vector<8x1xi32>
    %1 = tpu.iota {dimensions = array<i32: 1>} : vector<8x32xi32>
    %2 = vector.broadcast %0 : vector<8x1xi32> to vector<8x32xi32>
    %3 = arith.cmpi eq, %1, %2 : vector<8x32xi32>
    %4 = arith.extui %3 : vector<8x32xi1> to vector<8x32xi32>
    %5 = arith.sitofp %4 : vector<8x32xi32> to vector<8x32xf32>
    %6 = arith.truncf %5 : vector<8x32xf32> to vector<8x32xbf16>
    %c0_1 = arith.constant 0 : index
    %c0_2 = arith.constant 0 : index
    %7 = vector.load %arg2[%c0_1, %c0_2] : memref<32x64xbf16, #tpu.memory_space<vmem>>, vector<32x64xbf16>
    %cst = arith.constant dense<0.000000e+00> : vector<8x64xf32>
    %8 = tpu.matmul %6, %7, %cst {dimension_numbers = #tpu.dot_dimension_numbers<[1], [0], [0], [1], [0, 0, 1, 1], [], []>} : vector<8x32xbf16>, vector<32x64xbf16>, vector<8x64xf32> -> vector<8x64xf32>
    %c0_3 = arith.constant 0 : index
    %c0_4 = arith.constant 0 : index
    %9 = vector.load %arg3[%c0_3, %c0_4] : memref<1x64xf32, #tpu.memory_space<vmem>>, vector<1x64xf32>
    %10 = vector.broadcast %9 : vector<1x64xf32> to vector<8x64xf32>
    %11 = arith.addf %8, %10 : vector<8x64xf32>
    %cst_5 = arith.constant 0.000000e+00 : f32
    %12 = vector.broadcast %cst_5 : f32 to vector<8x64xf32>
    %13 = arith.cmpf ogt, %11, %12 : vector<8x64xf32>
    %cst_6 = arith.constant 2.000000e-01 : f32
    %14 = vector.broadcast %cst_6 : f32 to vector<8x64xf32>
    %15 = arith.mulf %14, %11 : vector<8x64xf32>
    %16 = arith.select %13, %11, %15 : vector<8x64xi1>, vector<8x64xf32>
    %17 = arith.truncf %16 : vector<8x64xf32> to vector<8x64xbf16>
    %c0_7 = arith.constant 0 : index
    %c0_8 = arith.constant 0 : index
    %18 = vector.load %arg4[%c0_7, %c0_8] : memref<64x64xbf16, #tpu.memory_space<vmem>>, vector<64x64xbf16>
    %cst_9 = arith.constant dense<0.000000e+00> : vector<8x64xf32>
    %19 = tpu.matmul %17, %18, %cst_9 {dimension_numbers = #tpu.dot_dimension_numbers<[1], [0], [0], [1], [0, 0, 1, 1], [], []>} : vector<8x64xbf16>, vector<64x64xbf16>, vector<8x64xf32> -> vector<8x64xf32>
    %c0_10 = arith.constant 0 : index
    %c0_11 = arith.constant 0 : index
    %20 = vector.load %arg5[%c0_10, %c0_11] : memref<1x64xf32, #tpu.memory_space<vmem>>, vector<1x64xf32>
    %21 = vector.broadcast %20 : vector<1x64xf32> to vector<8x64xf32>
    %22 = arith.addf %19, %21 : vector<8x64xf32>
    %cst_12 = arith.constant dense<0.000000e+00> : vector<8xf32>
    %23 = vector.multi_reduction <add>, %22, %cst_12 [1] : vector<8x64xf32> to vector<8xf32>
    %24 = vector.shape_cast %23 : vector<8xf32> to vector<8x1xf32>
    %cst_13 = arith.constant 6.400000e+01 : f32
    %25 = vector.broadcast %cst_13 : f32 to vector<8x1xf32>
    %26 = arith.divf %24, %25 : vector<8x1xf32>
    %27 = vector.broadcast %26 : vector<8x1xf32> to vector<8x64xf32>
    %28 = arith.subf %22, %27 : vector<8x64xf32>
    %29 = arith.mulf %28, %28 : vector<8x64xf32>
    %cst_14 = arith.constant dense<0.000000e+00> : vector<8xf32>
    %30 = vector.multi_reduction <add>, %29, %cst_14 [1] : vector<8x64xf32> to vector<8xf32>
    %31 = vector.shape_cast %30 : vector<8xf32> to vector<8x1xf32>
    %cst_15 = arith.constant 6.400000e+01 : f32
    %32 = vector.broadcast %cst_15 : f32 to vector<8x1xf32>
    %33 = arith.divf %31, %32 : vector<8x1xf32>
    %cst_16 = arith.constant 9.99999974E-6 : f32
    %34 = vector.broadcast %cst_16 : f32 to vector<8x1xf32>
    %35 = arith.addf %33, %34 : vector<8x1xf32>
    %36 = math.rsqrt %35 : vector<8x1xf32>
    %37 = vector.broadcast %36 : vector<8x1xf32> to vector<8x64xf32>
    %38 = arith.mulf %28, %37 : vector<8x64xf32>
    %c0_17 = arith.constant 0 : index
    %c0_18 = arith.constant 0 : index
    %39 = vector.load %arg6[%c0_17, %c0_18] : memref<1x64xf32, #tpu.memory_space<vmem>>, vector<1x64xf32>
    %40 = vector.broadcast %39 : vector<1x64xf32> to vector<8x64xf32>
    %41 = arith.mulf %38, %40 : vector<8x64xf32>
    %c0_19 = arith.constant 0 : index
    %c0_20 = arith.constant 0 : index
    %42 = vector.load %arg7[%c0_19, %c0_20] : memref<1x64xf32, #tpu.memory_space<vmem>>, vector<1x64xf32>
    %43 = vector.broadcast %42 : vector<1x64xf32> to vector<8x64xf32>
    %44 = arith.addf %41, %43 : vector<8x64xf32>
    %cst_21 = arith.constant 0.000000e+00 : f32
    %45 = vector.broadcast %cst_21 : f32 to vector<8x64xf32>
    %46 = arith.cmpf ogt, %44, %45 : vector<8x64xf32>
    %cst_22 = arith.constant 2.000000e-01 : f32
    %47 = vector.broadcast %cst_22 : f32 to vector<8x64xf32>
    %48 = arith.mulf %47, %44 : vector<8x64xf32>
    %49 = arith.select %46, %44, %48 : vector<8x64xi1>, vector<8x64xf32>
    %50 = arith.truncf %49 : vector<8x64xf32> to vector<8x64xbf16>
    %c0_23 = arith.constant 0 : index
    %c0_24 = arith.constant 0 : index
    %51 = vector.load %arg8[%c0_23, %c0_24] : memref<64x128xbf16, #tpu.memory_space<vmem>>, vector<64x128xbf16>
    %cst_25 = arith.constant dense<0.000000e+00> : vector<8x128xf32>
    %52 = tpu.matmul %50, %51, %cst_25 {dimension_numbers = #tpu.dot_dimension_numbers<[1], [0], [0], [1], [0, 0, 1, 1], [], []>} : vector<8x64xbf16>, vector<64x128xbf16>, vector<8x128xf32> -> vector<8x128xf32>
    %c0_26 = arith.constant 0 : index
    %c0_27 = arith.constant 0 : index
    %53 = vector.load %arg9[%c0_26, %c0_27] : memref<1x128xf32, #tpu.memory_space<vmem>>, vector<1x128xf32>
    %54 = vector.broadcast %53 : vector<1x128xf32> to vector<8x128xf32>
    %55 = arith.addf %52, %54 : vector<8x128xf32>
    %c0_28 = arith.constant 0 : index
    %c0_29 = arith.constant 0 : index
    %56 = vector.load %arg10[%c0_28, %c0_29] : memref<8x128xf32, #tpu.memory_space<vmem>>, vector<8x128xf32>
    tpu.vector_store %arg10[%c0_28, %c0_29], %55 {strides = array<i32>} : memref<8x128xf32, #tpu.memory_space<vmem>>, vector<8x128xf32>,
    return
  }
  func.func @transform_0(%arg0: i32) -> (i32, i32) {
    %c0_i32 = arith.constant 0 : i32
    %c0_i32_0 = arith.constant 0 : i32
    return %arg0, %c0_i32 : i32, i32
  }
  func.func @transform_1(%arg0: i32) -> (i32, i32) {
    %c0_i32 = arith.constant 0 : i32
    %c0_i32_0 = arith.constant 0 : i32
    %c0_i32_1 = arith.constant 0 : i32
    return %c0_i32, %c0_i32_0 : i32, i32
  }
  func.func @transform_2(%arg0: i32) -> (i32, i32) {
    %c0_i32 = arith.constant 0 : i32
    %c0_i32_0 = arith.constant 0 : i32
    %c0_i32_1 = arith.constant 0 : i32
    return %c0_i32, %c0_i32_0 : i32, i32
  }
  func.func @transform_3(%arg0: i32) -> (i32, i32) {
    %c0_i32 = arith.constant 0 : i32
    %c0_i32_0 = arith.constant 0 : i32
    %c0_i32_1 = arith.constant 0 : i32
    return %c0_i32, %c0_i32_0 : i32, i32
  }
  func.func @transform_4(%arg0: i32) -> (i32, i32) {
    %c0_i32 = arith.constant 0 : i32
    %c0_i32_0 = arith.constant 0 : i32
    %c0_i32_1 = arith.constant 0 : i32
    return %c0_i32, %c0_i32_0 : i32, i32
  }
  func.func @transform_5(%arg0: i32) -> (i32, i32) {
    %c0_i32 = arith.constant 0 : i32
    %c0_i32_0 = arith.constant 0 : i32
    %c0_i32_1 = arith.constant 0 : i32
    return %c0_i32, %c0_i32_0 : i32, i32
  }
  func.func @transform_6(%arg0: i32) -> (i32, i32) {
    %c0_i32 = arith.constant 0 : i32
    %c0_i32_0 = arith.constant 0 : i32
    %c0_i32_1 = arith.constant 0 : i32
    return %c0_i32, %c0_i32_0 : i32, i32
  }
  func.func @transform_7(%arg0: i32) -> (i32, i32) {
    %c0_i32 = arith.constant 0 : i32
    %c0_i32_0 = arith.constant 0 : i32
    %c0_i32_1 = arith.constant 0 : i32
    return %c0_i32, %c0_i32_0 : i32, i32
  }
  func.func @transform_8(%arg0: i32) -> (i32, i32) {
    %c0_i32 = arith.constant 0 : i32
    %c0_i32_0 = arith.constant 0 : i32
    %c0_i32_1 = arith.constant 0 : i32
    return %c0_i32, %c0_i32_0 : i32, i32
  }
  func.func @transform_9(%arg0: i32) -> (i32, i32) {
    %c0_i32 = arith.constant 0 : i32
    %c0_i32_0 = arith.constant 0 : i32
    return %arg0, %c0_i32 : i32, i32
  }
}

module attributes {stable_mosaic.version = 11 : i64} {
  func.func @kernel(%arg0: i32, %arg1: memref<8x1xi32, #tpu.memory_space<vmem>>, %arg2: memref<32x64xbf16, #tpu.memory_space<vmem>>, %arg3: memref<1x64xf32, #tpu.memory_space<vmem>>, %arg4: memref<64x64xbf16, #tpu.memory_space<vmem>>, %arg5: memref<1x64xf32, #tpu.memory_space<vmem>>, %arg6: memref<1x64xf32, #tpu.memory_space<vmem>>, %arg7: memref<1x64xf32, #tpu.memory_space<vmem>>, %arg8: memref<64x128xbf16, #tpu.memory_space<vmem>>, %arg9: memref<1x128xf32, #tpu.memory_space<vmem>>, %arg10: memref<8x128xf32, #tpu.memory_space<vmem>>) attributes {dimension_semantics = [#tpu.dimension_semantics<arbitrary>], iteration_bounds = array<i64: 1>, scalar_prefetch = 0 : i64, scratch_operands = 0 : i64, tpu.core_type = #tpu.core_type<tc>, window_params = [{transform_indices = @transform_0, window_bounds = array<i64: 8, 1>}, {pipeline_mode = #tpu.pipeline_mode<synchronous>, transform_indices = @transform_1, window_bounds = array<i64: 32, 64>}, {pipeline_mode = #tpu.pipeline_mode<synchronous>, transform_indices = @transform_2, window_bounds = array<i64: 1, 64>}, {pipeline_mode = #tpu.pipeline_mode<synchronous>, transform_indices = @transform_3, window_bounds = array<i64: 64, 64>}, {pipeline_mode = #tpu.pipeline_mode<synchronous>, transform_indices = @transform_4, window_bounds = array<i64: 1, 64>}, {pipeline_mode = #tpu.pipeline_mode<synchronous>, transform_indices = @transform_5, window_bounds = array<i64: 1, 64>}, {pipeline_mode = #tpu.pipeline_mode<synchronous>, transform_indices = @transform_6, window_bounds = array<i64: 1, 64>}, {pipeline_mode = #tpu.pipeline_mode<synchronous>, transform_indices = @transform_7, window_bounds = array<i64: 64, 128>}, {pipeline_mode = #tpu.pipeline_mode<synchronous>, transform_indices = @transform_8, window_bounds = array<i64: 1, 128>}, {transform_indices = @transform_9, window_bounds = array<i64: 8, 128>}]} {
    %c0 = arith.constant 0 : index
    %c0_0 = arith.constant 0 : index
    %0 = vector.load %arg1[%c0, %c0_0] : memref<8x1xi32, #tpu.memory_space<vmem>>, vector<8x1xi32>
    %1 = tpu.iota {dimensions = array<i32: 1>} : vector<8x32xi32>
    %2 = vector.broadcast %0 : vector<8x1xi32> to vector<8x32xi32>
    %3 = arith.cmpi eq, %1, %2 : vector<8x32xi32>
    %4 = arith.extui %3 : vector<8x32xi1> to vector<8x32xi32>
    %5 = arith.sitofp %4 : vector<8x32xi32> to vector<8x32xf32>
    %6 = arith.truncf %5 : vector<8x32xf32> to vector<8x32xbf16>
    %c0_1 = arith.constant 0 : index
    %c0_2 = arith.constant 0 : index
    %7 = vector.load %arg2[%c0_1, %c0_2] : memref<32x64xbf16, #tpu.memory_space<vmem>>, vector<32x64xbf16>
    %cst = arith.constant dense<0.000000e+00> : vector<8x64xf32>
    %8 = tpu.matmul %6, %7, %cst {dimension_numbers = #tpu.dot_dimension_numbers<[1], [0], [0], [1], [0, 0, 1, 1], [], []>} : vector<8x32xbf16>, vector<32x64xbf16>, vector<8x64xf32> -> vector<8x64xf32>
    %c0_3 = arith.constant 0 : index
    %c0_4 = arith.constant 0 : index
    %9 = vector.load %arg3[%c0_3, %c0_4] : memref<1x64xf32, #tpu.memory_space<vmem>>, vector<1x64xf32>
    %10 = vector.broadcast %9 : vector<1x64xf32> to vector<8x64xf32>
    %11 = arith.addf %8, %10 : vector<8x64xf32>
    %cst_5 = arith.constant 0.000000e+00 : f32
    %12 = vector.broadcast %cst_5 : f32 to vector<8x64xf32>
    %13 = arith.cmpf ogt, %11, %12 : vector<8x64xf32>
    %cst_6 = arith.constant 2.000000e-01 : f32
    %14 = vector.broadcast %cst_6 : f32 to vector<8x64xf32>
    %15 = arith.mulf %14, %11 : vector<8x64xf32>
    %16 = arith.select %13, %11, %15 : vector<8x64xi1>, vector<8x64xf32>
    %17 = arith.truncf %16 : vector<8x64xf32> to vector<8x64xbf16>
    %c0_7 = arith.constant 0 : index
    %c0_8 = arith.constant 0 : index
    %18 = vector.load %arg4[%c0_7, %c0_8] : memref<64x64xbf16, #tpu.memory_space<vmem>>, vector<64x64xbf16>
    %cst_9 = arith.constant dense<0.000000e+00> : vector<8x64xf32>
    %19 = tpu.matmul %17, %18, %cst_9 {dimension_numbers = #tpu.dot_dimension_numbers<[1], [0], [0], [1], [0, 0, 1, 1], [], []>} : vector<8x64xbf16>, vector<64x64xbf16>, vector<8x64xf32> -> vector<8x64xf32>
    %c0_10 = arith.constant 0 : index
    %c0_11 = arith.constant 0 : index
    %20 = vector.load %arg5[%c0_10, %c0_11] : memref<1x64xf32, #tpu.memory_space<vmem>>, vector<1x64xf32>
    %21 = vector.broadcast %20 : vector<1x64xf32> to vector<8x64xf32>
    %22 = arith.addf %19, %21 : vector<8x64xf32>
    %cst_12 = arith.constant dense<0.000000e+00> : vector<8xf32>
    %23 = vector.multi_reduction <add>, %22, %cst_12 [1] : vector<8x64xf32> to vector<8xf32>
    %24 = vector.shape_cast %23 : vector<8xf32> to vector<8x1xf32>
    %cst_13 = arith.constant 6.400000e+01 : f32
    %25 = vector.broadcast %cst_13 : f32 to vector<8x1xf32>
    %26 = arith.divf %24, %25 : vector<8x1xf32>
    %27 = vector.broadcast %26 : vector<8x1xf32> to vector<8x64xf32>
    %28 = arith.subf %22, %27 : vector<8x64xf32>
    %29 = arith.mulf %28, %28 : vector<8x64xf32>
    %cst_14 = arith.constant dense<0.000000e+00> : vector<8xf32>
    %30 = vector.multi_reduction <add>, %29, %cst_14 [1] : vector<8x64xf32> to vector<8xf32>
    %31 = vector.shape_cast %30 : vector<8xf32> to vector<8x1xf32>
    %cst_15 = arith.constant 6.400000e+01 : f32
    %32 = vector.broadcast %cst_15 : f32 to vector<8x1xf32>
    %33 = arith.divf %31, %32 : vector<8x1xf32>
    %cst_16 = arith.constant 9.99999974E-6 : f32
    %34 = vector.broadcast %cst_16 : f32 to vector<8x1xf32>
    %35 = arith.addf %33, %34 : vector<8x1xf32>
    %36 = math.rsqrt %35 : vector<8x1xf32>
    %37 = vector.broadcast %36 : vector<8x1xf32> to vector<8x64xf32>
    %38 = arith.mulf %28, %37 : vector<8x64xf32>
    %c0_17 = arith.constant 0 : index
    %c0_18 = arith.constant 0 : index
    %39 = vector.load %arg6[%c0_17, %c0_18] : memref<1x64xf32, #tpu.memory_space<vmem>>, vector<1x64xf32>
    %40 = vector.broadcast %39 : vector<1x64xf32> to vector<8x64xf32>
    %41 = arith.mulf %38, %40 : vector<8x64xf32>
    %c0_19 = arith.constant 0 : index
    %c0_20 = arith.constant 0 : index
    %42 = vector.load %arg7[%c0_19, %c0_20] : memref<1x64xf32, #tpu.memory_space<vmem>>, vector<1x64xf32>
    %43 = vector.broadcast %42 : vector<1x64xf32> to vector<8x64xf32>
    %44 = arith.addf %41, %43 : vector<8x64xf32>
    %cst_21 = arith.constant 0.000000e+00 : f32
    %45 = vector.broadcast %cst_21 : f32 to vector<8x64xf32>
    %46 = arith.cmpf ogt, %44, %45 : vector<8x64xf32>
    %cst_22 = arith.constant 2.000000e-01 : f32
    %47 = vector.broadcast %cst_22 : f32 to vector<8x64xf32>
    %48 = arith.mulf %47, %44 : vector<8x64xf32>
    %49 = arith.select %46, %44, %48 : vector<8x64xi1>, vector<8x64xf32>
    %50 = arith.truncf %49 : vector<8x64xf32> to vector<8x64xbf16>
    %c0_23 = arith.constant 0 : index
    %c0_24 = arith.constant 0 : index
    %51 = vector.load %arg8[%c0_23, %c0_24] : memref<64x128xbf16, #tpu.memory_space<vmem>>, vector<64x128xbf16>
    %cst_25 = arith.constant dense<0.000000e+00> : vector<8x128xf32>
    %52 = tpu.matmul %50, %51, %cst_25 {dimension_numbers = #tpu.dot_dimension_numbers<[1], [0], [0], [1], [0, 0, 1, 1], [], []>} : vector<8x64xbf16>, vector<64x128xbf16>, vector<8x128xf32> -> vector<8x128xf32>
    %c0_26 = arith.constant 0 : index
    %c0_27 = arith.constant 0 : index
    %53 = vector.load %arg9[%c0_26, %c0_27] : memref<1x128xf32, #tpu.memory_space<vmem>>, vector<1x128xf32>
    %54 = vector.broadcast %53 : vector<1x128xf32> to vector<8x128xf32>
    %55 = arith.addf %52, %54 : vector<8x128xf32>
    %c0_28 = arith.constant 0 : index
    %c0_29 = arith.constant 0 : index
    %56 = vector.load %arg10[%c0_28, %c0_29] : memref<8x128xf32, #tpu.memory_space<vmem>>, vector<8x128xf32>
    tpu.vector_store %arg10[%c0_28, %c0_29], %55 {strides = array<i32>} : memref<8x128xf32, #tpu.memory_space<vmem>>, vector<8x128xf32>,
    return
  }
  func.func @transform_0(%arg0: i32) -> (i32, i32) {
    %c0_i32 = arith.constant 0 : i32
    %c0_i32_0 = arith.constant 0 : i32
    return %arg0, %c0_i32 : i32, i32
  }
  func.func @transform_1(%arg0: i32) -> (i32, i32) {
    %c0_i32 = arith.constant 0 : i32
    %c0_i32_0 = arith.constant 0 : i32
    %c0_i32_1 = arith.constant 0 : i32
    return %c0_i32, %c0_i32_0 : i32, i32
  }
  func.func @transform_2(%arg0: i32) -> (i32, i32) {
    %c0_i32 = arith.constant 0 : i32
    %c0_i32_0 = arith.constant 0 : i32
    %c0_i32_1 = arith.constant 0 : i32
    return %c0_i32, %c0_i32_0 : i32, i32
  }
  func.func @transform_3(%arg0: i32) -> (i32, i32) {
    %c0_i32 = arith.constant 0 : i32
    %c0_i32_0 = arith.constant 0 : i32
    %c0_i32_1 = arith.constant 0 : i32
    return %c0_i32, %c0_i32_0 : i32, i32
  }
  func.func @transform_4(%arg0: i32) -> (i32, i32) {
    %c0_i32 = arith.constant 0 : i32
    %c0_i32_0 = arith.constant 0 : i32
    %c0_i32_1 = arith.constant 0 : i32
    return %c0_i32, %c0_i32_0 : i32, i32
  }
  func.func @transform_5(%arg0: i32) -> (i32, i32) {
    %c0_i32 = arith.constant 0 : i32
    %c0_i32_0 = arith.constant 0 : i32
    %c0_i32_1 = arith.constant 0 : i32
    return %c0_i32, %c0_i32_0 : i32, i32
  }
  func.func @transform_6(%arg0: i32) -> (i32, i32) {
    %c0_i32 = arith.constant 0 : i32
    %c0_i32_0 = arith.constant 0 : i32
    %c0_i32_1 = arith.constant 0 : i32
    return %c0_i32, %c0_i32_0 : i32, i32
  }
  func.func @transform_7(%arg0: i32) -> (i32, i32) {
    %c0_i32 = arith.constant 0 : i32
    %c0_i32_0 = arith.constant 0 : i32
    %c0_i32_1 = arith.constant 0 : i32
    return %c0_i32, %c0_i32_0 : i32, i32
  }
  func.func @transform_8(%arg0: i32) -> (i32, i32) {
    %c0_i32 = arith.constant 0 : i32
    %c0_i32_0 = arith.constant 0 : i32
    %c0_i32_1 = arith.constant 0 : i32
    return %c0_i32, %c0_i32_0 : i32, i32
  }
  func.func @transform_9(%arg0: i32) -> (i32, i32) {
    %c0_i32 = arith.constant 0 : i32
    %c0_i32_0 = arith.constant 0 : i32
    return %arg0, %c0_i32 : i32, i32
  }
}

</mosaic_0001>

<llo_original>
// kernel: tpu_custom_call.1
$region0: #{tpu_custom_call.1}
  #allocation0 [shape = 'u32[]', space=smem, size = 0x4, offset = 0x4, fixed_abs, tag = 'smem constant byte address 0x4 - core index']
  #allocation1 [shape = 'u32[144,128]{1,0:T(1,128)}', space=vmem, size = 0x12000, scoped, tag = 'internal scratch']
  %s0 = inlined_call_operand.vmem [shape: s32[8,1], index: 0, kind: input, shape index: {}]
  %s1 = inlined_call_operand.hbm [shape: bf16[32,64], index: 1, kind: input, shape index: {}]
  %s2 = inlined_call_operand.vmem [shape: f32[1,64], index: 2, kind: input, shape index: {}]
  %s3 = inlined_call_operand.hbm [shape: bf16[64,64], index: 3, kind: input, shape index: {}]
  %s4 = inlined_call_operand.vmem [shape: f32[1,64], index: 4, kind: input, shape index: {}]
  %s5 = inlined_call_operand.vmem [shape: f32[1,64], index: 5, kind: input, shape index: {}]
  %s6 = inlined_call_operand.vmem [shape: f32[1,64], index: 6, kind: input, shape index: {}]
  %s7 = inlined_call_operand.hbm [shape: bf16[64,128], index: 7, kind: input, shape index: {}]
  %s8 = inlined_call_operand.vmem [shape: f32[1,128], index: 8, kind: input, shape index: {}]
  %s9 = inlined_call_operand.hbm [shape: f32[8,128], index: 9, kind: output, shape index: {}]
  %s10 = sld [smem:[#allocation0]]
  $region58: #{tpu_custom_call.1} parent=0
    _
  %s12 = ssub.s32 1, %s10
  %s13 = scalar_select 0, %s12, %s10
  $region1: #{tpu_custom_call.1} parent=0
    #allocation2 [shape = 'u8[8192]{0}', space=vmem, size = 0x2000, scoped, tag = 'input window, operand 1, single buffered']
    #allocation3 [shape = 's32[1]{0}', space=sflag, size = 0x4, scoped, tag = 'scoped memory for tpu_custom_call.1']
    #allocation4 [shape = 's32[1]{0}', space=sflag, size = 0x4, scoped, tag = 'scoped memory for tpu_custom_call.1']
    #allocation5 [shape = 'u8[16384]{0}', space=vmem, size = 0x4000, scoped, tag = 'input window, operand 3, single buffered']
    #allocation6 [shape = 's32[1]{0}', space=sflag, size = 0x4, scoped, tag = 'scoped memory for tpu_custom_call.1']
    #allocation7 [shape = 'u8[16384]{0}', space=vmem, size = 0x4000, scoped, tag = 'input window, operand 7, single buffered']
    #allocation8 [shape = 'u8[4096]{0}', space=vmem, size = 0x1000, scoped, tag = 'output window, operand 0, single buffered']
    %14 = vsyncpa [#allocation3], 0
    %15 = vsyncpa [#allocation6], 0
    %16 = vsyncpa [#allocation4], 0
    // Predicated region
    $region2: #{tpu_custom_call.1} parent=1 // pred_check
      _
    $region3: #{tpu_custom_call.1} parent=1 // pred_check_branch
      %18 = sbr.rel (0) target = $region5
    $region4: #{tpu_custom_call.1} parent=1 // pred_region
      _
    $region5: #{tpu_custom_call.1} parent=1 // pred_fallthru
      _
    // Predicated region
    $region6: #{tpu_custom_call.1} parent=1 // pred_check
      _
    $region7: #{tpu_custom_call.1} parent=1 // pred_check_branch
      %20 = sbr.rel (0) target = $region9
    $region8: #{tpu_custom_call.1} parent=1 // pred_region
      %s22 = ssub.s32 256, 256
      %23 = vsyncadd [#allocation3], %s22
      %s24 = sshll.u32 [#allocation2], 4
      %s25 = int_to_ptr.vmem [resolvable:$true] %s24
      %30 = dma.hbm_to_vmem [thread:$0]  %s1, 256, %s25, [#allocation3], 64, 64, 4
    $region9: #{tpu_custom_call.1} parent=1 // pred_fallthru
      _
    // Predicated region
    $region10: #{tpu_custom_call.1} parent=1 // pred_check
      _
    $region11: #{tpu_custom_call.1} parent=1 // pred_check_branch
      %32 = sbr.rel (0) target = $region13
    $region12: #{tpu_custom_call.1} parent=1 // pred_region
      _
    $region13: #{tpu_custom_call.1} parent=1 // pred_fallthru
      _
    // Predicated region
    $region14: #{tpu_custom_call.1} parent=1 // pred_check
      _
    $region15: #{tpu_custom_call.1} parent=1 // pred_check_branch
      %34 = sbr.rel (0) target = $region17
    $region16: #{tpu_custom_call.1} parent=1 // pred_region
      %s36 = ssub.s32 512, 512
      %37 = vsyncadd [#allocation6], %s36
      %s38 = sshll.u32 [#allocation5], 4
      %s39 = int_to_ptr.vmem [resolvable:$true] %s38
      %44 = dma.hbm_to_vmem [thread:$0]  %s3, 512, %s39, [#allocation6], 64, 64, 4
    $region17: #{tpu_custom_call.1} parent=1 // pred_fallthru
      _
    // Predicated region
    $region18: #{tpu_custom_call.1} parent=1 // pred_check
      _
    $region19: #{tpu_custom_call.1} parent=1 // pred_check_branch
      %46 = sbr.rel (0) target = $region21
    $region20: #{tpu_custom_call.1} parent=1 // pred_region
      _
    $region21: #{tpu_custom_call.1} parent=1 // pred_fallthru
      _
    // Predicated region
    $region22: #{tpu_custom_call.1} parent=1 // pred_check
      _
    $region23: #{tpu_custom_call.1} parent=1 // pred_check_branch
      %48 = sbr.rel (0) target = $region25
    $region24: #{tpu_custom_call.1} parent=1 // pred_region
      _
    $region25: #{tpu_custom_call.1} parent=1 // pred_fallthru
      _
    // Predicated region
    $region26: #{tpu_custom_call.1} parent=1 // pred_check
      _
    $region27: #{tpu_custom_call.1} parent=1 // pred_check_branch
      %50 = sbr.rel (0) target = $region29
    $region28: #{tpu_custom_call.1} parent=1 // pred_region
      _
    $region29: #{tpu_custom_call.1} parent=1 // pred_fallthru
      _
    // Predicated region
    $region30: #{tpu_custom_call.1} parent=1 // pred_check
      _
    $region31: #{tpu_custom_call.1} parent=1 // pred_check_branch
      %52 = sbr.rel (0) target = $region33
    $region32: #{tpu_custom_call.1} parent=1 // pred_region
      %s54 = ssub.s32 512, 512
      %55 = vsyncadd [#allocation6], %s54
      %s56 = sshll.u32 [#allocation7], 4
      %s57 = int_to_ptr.vmem [resolvable:$true] %s56
      %62 = dma.hbm_to_vmem [thread:$0]  %s7, 512, %s57, [#allocation6], 64, 64, 4
    $region33: #{tpu_custom_call.1} parent=1 // pred_fallthru
      _
    // Predicated region
    $region34: #{tpu_custom_call.1} parent=1 // pred_check
      _
    $region35: #{tpu_custom_call.1} parent=1 // pred_check_branch
      %64 = sbr.rel (0) target = $region37
    $region36: #{tpu_custom_call.1} parent=1 // pred_region
      _
    $region37: #{tpu_custom_call.1} parent=1 // pred_fallthru
      _
    // Predicated region
    $region38: #{tpu_custom_call.1} parent=1 // pred_check
      _
    $region39: #{tpu_custom_call.1} parent=1 // pred_check_branch
      %66 = sbr.rel (0) target = $region41
    $region40: #{tpu_custom_call.1} parent=1 // pred_region
      %67 = dma.done [#allocation3], 256
    $region41: #{tpu_custom_call.1} parent=1 // pred_fallthru
      _
    // Predicated region
    $region42: #{tpu_custom_call.1} parent=1 // pred_check
      _
    $region43: #{tpu_custom_call.1} parent=1 // pred_check_branch
      %69 = sbr.rel (0) target = $region45
    $region44: #{tpu_custom_call.1} parent=1 // pred_region
      %70 = dma.done [#allocation6], 512
    $region45: #{tpu_custom_call.1} parent=1 // pred_fallthru
      _
    // Predicated region
    $region46: #{tpu_custom_call.1} parent=1 // pred_check
      _
    $region47: #{tpu_custom_call.1} parent=1 // pred_check_branch
      %72 = sbr.rel (0) target = $region49
    $region48: #{tpu_custom_call.1} parent=1 // pred_region
      %73 = dma.done [#allocation6], 512
    $region49: #{tpu_custom_call.1} parent=1 // pred_fallthru
      _
    %v75 = vld [vmem:[%s0] sm:$0xff]
    %v76 = vlaneseq
    %v77 = vand.u32 %v76, 127
    %78 = vset.pattern.permute.xlu0 0
    %79 = vperm.xlu0 %78, %v75
    %v80 = vpop.permute.xlu0 %79
    %vm81 = vcmp.eq.s32.totalorder %v77, %v80
    %v82 = vsel %vm81, 1, 0
    %v83 = vcvt.s32.f32 %v82
    %v84 = vpack.c.bf16 %v83, %v83
    %v85 = vld [vmem:[#allocation2] sm:$0xf]
    %v86 = vld [vmem:[#allocation2 + $0x4] sm:$0xf]
    %v87 = vld [vmem:[#allocation2 + $0x8] sm:$0xf]
    %v88 = vld [vmem:[#allocation2 + $0xc] sm:$0xf]
    %v89 = vld [vmem:[%s2] sm:$0x1]
    %v91 = vlaneseq
    %v92 = vshrl.u32 %v91, 7
    %v93 = vsub.s32 0, %v92
    %v94 = vrot.slane %v89, %v93
    %v100 = vunpack.c.l.b16 %v85
    %v101 = vunpack.c.l.b16 %v86
    %v102 = vunpack.c.l.b16 %v87
    %v103 = vunpack.c.l.b16 %v88
    %v104 = vpack.c.b16 %v101, %v100
    %v105 = vpack.c.b16 %v103, %v102
    %vm108 = vcmask 261120
    %v110 = vsel %vm108, %v84, 0
    %112 = vmatprep.subr.bf16.mxu0 0
    %113 = vmatpush1.bf16.msra.mxu0 0
    %114 = vmatprep.subr.bf16.mxu0 0
    %115 = vmatpush1.bf16.msra.mxu0 0
    %116 = vmatprep.subr.bf16.mxu0 0
    %117 = vmatpush1.bf16.msra.mxu0 0
    %118 = vmatprep.subr.bf16.mxu0 0
    %119 = vmatpush1.bf16.msra.mxu0 0
    %120 = vmatprep.subr.bf16.mxu0 0
    %121 = vmatpush1.bf16.msra.mxu0 0
    %122 = vmatprep.subr.bf16.mxu0 0
    %123 = vmatpush1.bf16.msra.mxu0 0
    %124 = vmatprep.subr.bf16.mxu0 0
    %125 = vmatpush1.bf16.msra.mxu0 %v105
    %126 = vmatprep.subr.bf16.mxu0 0
    %127 = vmatpush1.bf16.msra.mxu0 %v104
    %128 = vmatprep.subr.bf16.mxu0 0
    %129 = vmatpush2.bf16.msra.mxu0 0
    %130 = vmatprep.subr.bf16.mxu0 0
    %131 = vmatpush2.bf16.msra.mxu0 0
    %132 = vmatprep.subr.bf16.mxu0 0
    %133 = vmatpush2.bf16.msra.mxu0 0
    %134 = vmatprep.subr.bf16.mxu0 0
    %135 = vmatpush2.bf16.msra.mxu0 0
    %136 = vmatprep.subr.bf16.mxu0 0
    %137 = vmatpush2.bf16.msra.mxu0 0
    %138 = vmatprep.subr.bf16.mxu0 0
    %139 = vmatpush2.bf16.msra.mxu0 0
    %140 = vmatprep.subr.bf16.mxu0 0
    %141 = vmatpush2.bf16.msra.mxu0 0
    %142 = vmatprep.subr.bf16.mxu0 0
    %143 = vmatpush2.bf16.msra.mxu0 0
    %144 = vmatprep.mubr.bf16.mxu0 0
    %145 = vmatmul.mubr.bf16.gmra.mxu0 %v110
    %v146 = vpop.f32.mrf.mxu0
    %v147 = vadd.f32 %v94, %v146
    %v148 = vpop.f32.mrf.mxu0
    %v149 = vpop.f32.mrf.mxu0
    %v150 = vpop.f32.mrf.mxu0
    %151 = vdwg.mxu0
    %vm152 = vcmp.gt.f32.partialorder %v147, 0.0
    %v153 = vmul.f32 %v147, 0.2
    %v154 = vsel %vm152, %v147, %v153
    %v155 = vpack.c.bf16 %v154, %v154
    %v156 = vld [vmem:[#allocation5] sm:$0xf]
    %v157 = vld [vmem:[#allocation5 + $0x4] sm:$0xf]
    %v158 = vld [vmem:[#allocation5 + $0x8] sm:$0xf]
    %v159 = vld [vmem:[#allocation5 + $0xc] sm:$0xf]
    %v160 = vld [vmem:[#allocation5 + $0x10] sm:$0xf]
    %v161 = vld [vmem:[#allocation5 + $0x14] sm:$0xf]
    %v162 = vld [vmem:[#allocation5 + $0x18] sm:$0xf]
    %v163 = vld [vmem:[#allocation5 + $0x1c] sm:$0xf]
    %v164 = vld [vmem:[%s4] sm:$0x1]
    %v166 = vlaneseq
    %v167 = vshrl.u32 %v166, 7
    %v168 = vsub.s32 0, %v167
    %v169 = vrot.slane %v164, %v168
    %v179 = vunpack.c.l.b16 %v156
    %v180 = vunpack.c.l.b16 %v157
    %v181 = vunpack.c.l.b16 %v158
    %v182 = vunpack.c.l.b16 %v159
    %v183 = vunpack.c.l.b16 %v160
    %v184 = vunpack.c.l.b16 %v161
    %v185 = vunpack.c.l.b16 %v162
    %v186 = vunpack.c.l.b16 %v163
    %v187 = vpack.c.b16 %v180, %v179
    %v188 = vpack.c.b16 %v182, %v181
    %v189 = vpack.c.b16 %v184, %v183
    %v190 = vpack.c.b16 %v186, %v185
    %vm195 = vcmask 523264
    %v197 = vsel %vm195, %v155, 0
    %199 = vmatprep.subr.bf16.mxu0 0
    %200 = vmatpush1.bf16.msra.mxu0 0
    %201 = vmatprep.subr.bf16.mxu0 0
    %202 = vmatpush1.bf16.msra.mxu0 0
    %203 = vmatprep.subr.bf16.mxu0 0
    %204 = vmatpush1.bf16.msra.mxu0 0
    %205 = vmatprep.subr.bf16.mxu0 0
    %206 = vmatpush1.bf16.msra.mxu0 0
    %207 = vmatprep.subr.bf16.mxu0 0
    %208 = vmatpush1.bf16.msra.mxu0 %v190
    %209 = vmatprep.subr.bf16.mxu0 0
    %210 = vmatpush1.bf16.msra.mxu0 %v189
    %211 = vmatprep.subr.bf16.mxu0 0
    %212 = vmatpush1.bf16.msra.mxu0 %v188
    %213 = vmatprep.subr.bf16.mxu0 0
    %214 = vmatpush1.bf16.msra.mxu0 %v187
    %215 = vmatprep.subr.bf16.mxu0 0
    %216 = vmatpush2.bf16.msra.mxu0 0
    %217 = vmatprep.subr.bf16.mxu0 0
    %218 = vmatpush2.bf16.msra.mxu0 0
    %219 = vmatprep.subr.bf16.mxu0 0
    %220 = vmatpush2.bf16.msra.mxu0 0
    %221 = vmatprep.subr.bf16.mxu0 0
    %222 = vmatpush2.bf16.msra.mxu0 0
    %223 = vmatprep.subr.bf16.mxu0 0
    %224 = vmatpush2.bf16.msra.mxu0 0
    %225 = vmatprep.subr.bf16.mxu0 0
    %226 = vmatpush2.bf16.msra.mxu0 0
    %227 = vmatprep.subr.bf16.mxu0 0
    %228 = vmatpush2.bf16.msra.mxu0 0
    %229 = vmatprep.subr.bf16.mxu0 0
    %230 = vmatpush2.bf16.msra.mxu0 0
    %231 = vmatprep.mubr.bf16.mxu0 0
    %232 = vmatmul.mubr.bf16.gmra.mxu0 %v197
    %v233 = vpop.f32.mrf.mxu0
    %v234 = vadd.f32 %v169, %v233
    %v235 = vpop.f32.mrf.mxu0
    %v236 = vpop.f32.mrf.mxu0
    %v237 = vpop.f32.mrf.mxu0
    %238 = vdwg.mxu0
    %v239 = vsel %vm195, %v234, 0.0
    %240 = vadd.xlane.f32.xlu0 %v239
    %v241 = vpop.xlane.xlu0 %240
    %v242 = vrcp.pop 64.0
    %v243 = vmul.f32 %v241, %v242
    %v244 = vsub.f32 %v234, %v243
    %v245 = vmul.f32 %v244, %v244
    %v246 = vsel %vm195, %v245, 0.0
    %247 = vadd.xlane.f32.xlu0 %v246
    %v248 = vpop.xlane.xlu0 %247
    %v249 = vmul.f32 %v248, %v242
    %v250 = vadd.f32 %v249, 1e-05
    %v251 = vrsqrt.pop %v250
    %v252 = vmul.f32 %v244, %v251
    %v253 = vld [vmem:[%s5] sm:$0x1]
    %v255 = vlaneseq
    %v256 = vshrl.u32 %v255, 7
    %v257 = vsub.s32 0, %v256
    %v258 = vrot.slane %v253, %v257
    %v260 = vmul.f32 %v252, %v258
    %v261 = vld [vmem:[%s6] sm:$0x1]
    %v263 = vlaneseq
    %v264 = vshrl.u32 %v263, 7
    %v265 = vsub.s32 0, %v264
    %v266 = vrot.slane %v261, %v265
    %v268 = vadd.f32 %v260, %v266
    %vm269 = vcmp.gt.f32.partialorder %v268, 0.0
    %v270 = vmul.f32 %v268, 0.2
    %v271 = vsel %vm269, %v268, %v270
    %v272 = vpack.c.bf16 %v271, %v271
    %v273 = vld [vmem:[#allocation7] sm:$0xf]
    %v274 = vld [vmem:[#allocation7 + $0x4] sm:$0xf]
    %v275 = vld [vmem:[#allocation7 + $0x8] sm:$0xf]
    %v276 = vld [vmem:[#allocation7 + $0xc] sm:$0xf]
    %v277 = vld [vmem:[#allocation7 + $0x10] sm:$0xf]
    %v278 = vld [vmem:[#allocation7 + $0x14] sm:$0xf]
    %v279 = vld [vmem:[#allocation7 + $0x18] sm:$0xf]
    %v280 = vld [vmem:[#allocation7 + $0x1c] sm:$0xf]
    %v281 = vld [vmem:[%s8] sm:$0x1]
    %v283 = vlaneseq
    %v284 = vshrl.u32 %v283, 7
    %v285 = vsub.s32 0, %v284
    %v286 = vrot.slane %v281, %v285
    %v296 = vunpack.c.l.b16 %v273
    %v297 = vunpack.c.l.b16 %v274
    %v298 = vunpack.c.l.b16 %v275
    %v299 = vunpack.c.l.b16 %v276
    %v300 = vunpack.c.l.b16 %v277
    %v301 = vunpack.c.l.b16 %v278
    %v302 = vunpack.c.l.b16 %v279
    %v303 = vunpack.c.l.b16 %v280
    %v304 = vpack.c.b16 %v297, %v296
    %v305 = vpack.c.b16 %v299, %v298
    %v306 = vpack.c.b16 %v301, %v300
    %v307 = vpack.c.b16 %v303, %v302
    %v313 = vsel %vm195, %v272, 0
    %315 = vmatprep.subr.bf16.mxu0 0
    %316 = vmatpush1.bf16.msra.mxu0 0
    %317 = vmatprep.subr.bf16.mxu0 0
    %318 = vmatpush1.bf16.msra.mxu0 0
    %319 = vmatprep.subr.bf16.mxu0 0
    %320 = vmatpush1.bf16.msra.mxu0 0
    %321 = vmatprep.subr.bf16.mxu0 0
    %322 = vmatpush1.bf16.msra.mxu0 0
    %323 = vmatprep.subr.bf16.mxu0 0
    %324 = vmatpush1.bf16.msra.mxu0 %v307
    %325 = vmatprep.subr.bf16.mxu0 0
    %326 = vmatpush1.bf16.msra.mxu0 %v306
    %327 = vmatprep.subr.bf16.mxu0 0
    %328 = vmatpush1.bf16.msra.mxu0 %v305
    %329 = vmatprep.subr.bf16.mxu0 0
    %330 = vmatpush1.bf16.msra.mxu0 %v304
    %331 = vmatprep.subr.bf16.mxu0 0
    %332 = vmatpush2.bf16.msra.mxu0 0
    %333 = vmatprep.subr.bf16.mxu0 0
    %334 = vmatpush2.bf16.msra.mxu0 0
    %335 = vmatprep.subr.bf16.mxu0 0
    %336 = vmatpush2.bf16.msra.mxu0 0
    %337 = vmatprep.subr.bf16.mxu0 0
    %338 = vmatpush2.bf16.msra.mxu0 0
    %339 = vmatprep.subr.bf16.mxu0 0
    %340 = vmatpush2.bf16.msra.mxu0 0
    %341 = vmatprep.subr.bf16.mxu0 0
    %342 = vmatpush2.bf16.msra.mxu0 0
    %343 = vmatprep.subr.bf16.mxu0 0
    %344 = vmatpush2.bf16.msra.mxu0 0
    %345 = vmatprep.subr.bf16.mxu0 0
    %346 = vmatpush2.bf16.msra.mxu0 0
    %347 = vmatprep.mubr.bf16.mxu0 0
    %348 = vmatmul.mubr.bf16.gmra.mxu0 %v313
    %v349 = vpop.f32.mrf.mxu0
    %v350 = vadd.f32 %v286, %v349
    %v351 = vpop.f32.mrf.mxu0
    %v352 = vpop.f32.mrf.mxu0
    %v353 = vpop.f32.mrf.mxu0
    %354 = vdwg.mxu0
    %355 = vst [vmem:[#allocation8] sm:$0xff] %v350
    // Predicated region
    $region50: #{tpu_custom_call.1} parent=1 // pred_check
      _
    $region51: #{tpu_custom_call.1} parent=1 // pred_check_branch
      %357 = sbr.rel (0) target = $region53
    $region52: #{tpu_custom_call.1} parent=1 // pred_region
      %s359 = ssub.s32 128, 128
      %360 = vsyncadd [#allocation4], %s359
      %s362 = sshll.u32 [#allocation8], 4
      %s363 = int_to_ptr.vmem [resolvable:$true] %s362
      %365 = dma.vmem_to_hbm [thread:$0]  %s363, 128, %s9, [#allocation4]
    $region53: #{tpu_custom_call.1} parent=1 // pred_fallthru
      _
    // Predicated region
    $region54: #{tpu_custom_call.1} parent=1 // pred_check
      _
    $region55: #{tpu_custom_call.1} parent=1 // pred_check_branch
      %367 = sbr.rel (0) target = $region57
    $region56: #{tpu_custom_call.1} parent=1 // pred_region
      %368 = dma.done [#allocation4], 128
    $region57: #{tpu_custom_call.1} parent=1 // pred_fallthru
      _
    %369 = vsyncpa [#allocation3], 1
    %370 = vsyncpa [#allocation6], 1
    %371 = vsyncpa [#allocation4], 1

// kernel: tpu_custom_call.1
$region0: #{tpu_custom_call.1}
  #allocation0 [shape = 'u32[]', space=smem, size = 0x4, offset = 0x4, fixed_abs, tag = 'smem constant byte address 0x4 - core index']
  #allocation1 [shape = 'u32[144,128]{1,0:T(1,128)}', space=vmem, size = 0x12000, scoped, tag = 'internal scratch']
  %s0 = inlined_call_operand.vmem [shape: s32[8,1], index: 0, kind: input, shape index: {}]
  %s1 = inlined_call_operand.hbm [shape: bf16[32,64], index: 1, kind: input, shape index: {}]
  %s2 = inlined_call_operand.vmem [shape: f32[1,64], index: 2, kind: input, shape index: {}]
  %s3 = inlined_call_operand.hbm [shape: bf16[64,64], index: 3, kind: input, shape index: {}]
  %s4 = inlined_call_operand.vmem [shape: f32[1,64], index: 4, kind: input, shape index: {}]
  %s5 = inlined_call_operand.vmem [shape: f32[1,64], index: 5, kind: input, shape index: {}]
  %s6 = inlined_call_operand.vmem [shape: f32[1,64], index: 6, kind: input, shape index: {}]
  %s7 = inlined_call_operand.hbm [shape: bf16[64,128], index: 7, kind: input, shape index: {}]
  %s8 = inlined_call_operand.vmem [shape: f32[1,128], index: 8, kind: input, shape index: {}]
  %s9 = inlined_call_operand.hbm [shape: f32[8,128], index: 9, kind: output, shape index: {}]
  %s10 = sld [smem:[#allocation0]]
  $region58: #{tpu_custom_call.1} parent=0
    _
  %s12 = ssub.s32 1, %s10
  %s13 = scalar_select 0, %s12, %s10
  $region1: #{tpu_custom_call.1} parent=0
    #allocation2 [shape = 'u8[8192]{0}', space=vmem, size = 0x2000, scoped, tag = 'input window, operand 1, single buffered']
    #allocation3 [shape = 's32[1]{0}', space=sflag, size = 0x4, scoped, tag = 'scoped memory for tpu_custom_call.1']
    #allocation4 [shape = 's32[1]{0}', space=sflag, size = 0x4, scoped, tag = 'scoped memory for tpu_custom_call.1']
    #allocation5 [shape = 'u8[16384]{0}', space=vmem, size = 0x4000, scoped, tag = 'input window, operand 3, single buffered']
    #allocation6 [shape = 's32[1]{0}', space=sflag, size = 0x4, scoped, tag = 'scoped memory for tpu_custom_call.1']
    #allocation7 [shape = 'u8[16384]{0}', space=vmem, size = 0x4000, scoped, tag = 'input window, operand 7, single buffered']
    #allocation8 [shape = 'u8[4096]{0}', space=vmem, size = 0x1000, scoped, tag = 'output window, operand 0, single buffered']
    %14 = vsyncpa [#allocation3], 0
    %15 = vsyncpa [#allocation6], 0
    %16 = vsyncpa [#allocation4], 0
    // Predicated region
    $region2: #{tpu_custom_call.1} parent=1 // pred_check
      _
    $region3: #{tpu_custom_call.1} parent=1 // pred_check_branch
      %18 = sbr.rel (0) target = $region5
    $region4: #{tpu_custom_call.1} parent=1 // pred_region
      _
    $region5: #{tpu_custom_call.1} parent=1 // pred_fallthru
      _
    // Predicated region
    $region6: #{tpu_custom_call.1} parent=1 // pred_check
      _
    $region7: #{tpu_custom_call.1} parent=1 // pred_check_branch
      %20 = sbr.rel (0) target = $region9
    $region8: #{tpu_custom_call.1} parent=1 // pred_region
      %s22 = ssub.s32 256, 256
      %23 = vsyncadd [#allocation3], %s22
      %s24 = sshll.u32 [#allocation2], 4
      %s25 = int_to_ptr.vmem [resolvable:$true] %s24
      %30 = dma.hbm_to_vmem [thread:$0]  %s1, 256, %s25, [#allocation3], 64, 64, 4
    $region9: #{tpu_custom_call.1} parent=1 // pred_fallthru
      _
    // Predicated region
    $region10: #{tpu_custom_call.1} parent=1 // pred_check
      _
    $region11: #{tpu_custom_call.1} parent=1 // pred_check_branch
      %32 = sbr.rel (0) target = $region13
    $region12: #{tpu_custom_call.1} parent=1 // pred_region
      _
    $region13: #{tpu_custom_call.1} parent=1 // pred_fallthru
      _
    // Predicated region
    $region14: #{tpu_custom_call.1} parent=1 // pred_check
      _
    $region15: #{tpu_custom_call.1} parent=1 // pred_check_branch
      %34 = sbr.rel (0) target = $region17
    $region16: #{tpu_custom_call.1} parent=1 // pred_region
      %s36 = ssub.s32 512, 512
      %37 = vsyncadd [#allocation6], %s36
      %s38 = sshll.u32 [#allocation5], 4
      %s39 = int_to_ptr.vmem [resolvable:$true] %s38
      %44 = dma.hbm_to_vmem [thread:$0]  %s3, 512, %s39, [#allocation6], 64, 64, 4
    $region17: #{tpu_custom_call.1} parent=1 // pred_fallthru
      _
    // Predicated region
    $region18: #{tpu_custom_call.1} parent=1 // pred_check
      _
    $region19: #{tpu_custom_call.1} parent=1 // pred_check_branch
      %46 = sbr.rel (0) target = $region21
    $region20: #{tpu_custom_call.1} parent=1 // pred_region
      _
    $region21: #{tpu_custom_call.1} parent=1 // pred_fallthru
      _
    // Predicated region
    $region22: #{tpu_custom_call.1} parent=1 // pred_check
      _
    $region23: #{tpu_custom_call.1} parent=1 // pred_check_branch
      %48 = sbr.rel (0) target = $region25
    $region24: #{tpu_custom_call.1} parent=1 // pred_region
      _
    $region25: #{tpu_custom_call.1} parent=1 // pred_fallthru
      _
    // Predicated region
    $region26: #{tpu_custom_call.1} parent=1 // pred_check
      _
    $region27: #{tpu_custom_call.1} parent=1 // pred_check_branch
      %50 = sbr.rel (0) target = $region29
    $region28: #{tpu_custom_call.1} parent=1 // pred_region
      _
    $region29: #{tpu_custom_call.1} parent=1 // pred_fallthru
      _
    // Predicated region
    $region30: #{tpu_custom_call.1} parent=1 // pred_check
      _
    $region31: #{tpu_custom_call.1} parent=1 // pred_check_branch
      %52 = sbr.rel (0) target = $region33
    $region32: #{tpu_custom_call.1} parent=1 // pred_region
      %s54 = ssub.s32 512, 512
      %55 = vsyncadd [#allocation6], %s54
      %s56 = sshll.u32 [#allocation7], 4
      %s57 = int_to_ptr.vmem [resolvable:$true] %s56
      %62 = dma.hbm_to_vmem [thread:$0]  %s7, 512, %s57, [#allocation6], 64, 64, 4
    $region33: #{tpu_custom_call.1} parent=1 // pred_fallthru
      _
    // Predicated region
    $region34: #{tpu_custom_call.1} parent=1 // pred_check
      _
    $region35: #{tpu_custom_call.1} parent=1 // pred_check_branch
      %64 = sbr.rel (0) target = $region37
    $region36: #{tpu_custom_call.1} parent=1 // pred_region
      _
    $region37: #{tpu_custom_call.1} parent=1 // pred_fallthru
      _
    // Predicated region
    $region38: #{tpu_custom_call.1} parent=1 // pred_check
      _
    $region39: #{tpu_custom_call.1} parent=1 // pred_check_branch
      %66 = sbr.rel (0) target = $region41
    $region40: #{tpu_custom_call.1} parent=1 // pred_region
      %67 = dma.done [#allocation3], 256
    $region41: #{tpu_custom_call.1} parent=1 // pred_fallthru
      _
    // Predicated region
    $region42: #{tpu_custom_call.1} parent=1 // pred_check
      _
    $region43: #{tpu_custom_call.1} parent=1 // pred_check_branch
      %69 = sbr.rel (0) target = $region45
    $region44: #{tpu_custom_call.1} parent=1 // pred_region
      %70 = dma.done [#allocation6], 512
    $region45: #{tpu_custom_call.1} parent=1 // pred_fallthru
      _
    // Predicated region
    $region46: #{tpu_custom_call.1} parent=1 // pred_check
      _
    $region47: #{tpu_custom_call.1} parent=1 // pred_check_branch
      %72 = sbr.rel (0) target = $region49
    $region48: #{tpu_custom_call.1} parent=1 // pred_region
      %73 = dma.done [#allocation6], 512
    $region49: #{tpu_custom_call.1} parent=1 // pred_fallthru
      _
    %v75 = vld [vmem:[%s0] sm:$0xff]
    %v76 = vlaneseq
    %v77 = vand.u32 %v76, 127
    %78 = vset.pattern.permute.xlu0 0
    %79 = vperm.xlu0 %78, %v75
    %v80 = vpop.permute.xlu0 %79
    %vm81 = vcmp.eq.s32.totalorder %v77, %v80
    %v82 = vsel %vm81, 1, 0
    %v83 = vcvt.s32.f32 %v82
    %v84 = vpack.c.bf16 %v83, %v83
    %v85 = vld [vmem:[#allocation2] sm:$0xf]
    %v86 = vld [vmem:[#allocation2 + $0x4] sm:$0xf]
    %v87 = vld [vmem:[#allocation2 + $0x8] sm:$0xf]
    %v88 = vld [vmem:[#allocation2 + $0xc] sm:$0xf]
    %v89 = vld [vmem:[%s2] sm:$0x1]
    %v91 = vlaneseq
    %v92 = vshrl.u32 %v91, 7
    %v93 = vsub.s32 0, %v92
    %v94 = vrot.slane %v89, %v93
    %v100 = vunpack.c.l.b16 %v85
    %v101 = vunpack.c.l.b16 %v86
    %v102 = vunpack.c.l.b16 %v87
    %v103 = vunpack.c.l.b16 %v88
    %v104 = vpack.c.b16 %v101, %v100
    %v105 = vpack.c.b16 %v103, %v102
    %vm108 = vcmask 261120
    %v110 = vsel %vm108, %v84, 0
    %112 = vmatprep.subr.bf16.mxu0 0
    %113 = vmatpush1.bf16.msra.mxu0 0
    %114 = vmatprep.subr.bf16.mxu0 0
    %115 = vmatpush1.bf16.msra.mxu0 0
    %116 = vmatprep.subr.bf16.mxu0 0
    %117 = vmatpush1.bf16.msra.mxu0 0
    %118 = vmatprep.subr.bf16.mxu0 0
    %119 = vmatpush1.bf16.msra.mxu0 0
    %120 = vmatprep.subr.bf16.mxu0 0
    %121 = vmatpush1.bf16.msra.mxu0 0
    %122 = vmatprep.subr.bf16.mxu0 0
    %123 = vmatpush1.bf16.msra.mxu0 0
    %124 = vmatprep.subr.bf16.mxu0 0
    %125 = vmatpush1.bf16.msra.mxu0 %v105
    %126 = vmatprep.subr.bf16.mxu0 0
    %127 = vmatpush1.bf16.msra.mxu0 %v104
    %128 = vmatprep.subr.bf16.mxu0 0
    %129 = vmatpush2.bf16.msra.mxu0 0
    %130 = vmatprep.subr.bf16.mxu0 0
    %131 = vmatpush2.bf16.msra.mxu0 0
    %132 = vmatprep.subr.bf16.mxu0 0
    %133 = vmatpush2.bf16.msra.mxu0 0
    %134 = vmatprep.subr.bf16.mxu0 0
    %135 = vmatpush2.bf16.msra.mxu0 0
    %136 = vmatprep.subr.bf16.mxu0 0
    %137 = vmatpush2.bf16.msra.mxu0 0
    %138 = vmatprep.subr.bf16.mxu0 0
    %139 = vmatpush2.bf16.msra.mxu0 0
    %140 = vmatprep.subr.bf16.mxu0 0
    %141 = vmatpush2.bf16.msra.mxu0 0
    %142 = vmatprep.subr.bf16.mxu0 0
    %143 = vmatpush2.bf16.msra.mxu0 0
    %144 = vmatprep.mubr.bf16.mxu0 0
    %145 = vmatmul.mubr.bf16.gmra.mxu0 %v110
    %v146 = vpop.f32.mrf.mxu0
    %v147 = vadd.f32 %v94, %v146
    %v148 = vpop.f32.mrf.mxu0
    %v149 = vpop.f32.mrf.mxu0
    %v150 = vpop.f32.mrf.mxu0
    %151 = vdwg.mxu0
    %vm152 = vcmp.gt.f32.partialorder %v147, 0.0
    %v153 = vmul.f32 %v147, 0.2
    %v154 = vsel %vm152, %v147, %v153
    %v155 = vpack.c.bf16 %v154, %v154
    %v156 = vld [vmem:[#allocation5] sm:$0xf]
    %v157 = vld [vmem:[#allocation5 + $0x4] sm:$0xf]
    %v158 = vld [vmem:[#allocation5 + $0x8] sm:$0xf]
    %v159 = vld [vmem:[#allocation5 + $0xc] sm:$0xf]
    %v160 = vld [vmem:[#allocation5 + $0x10] sm:$0xf]
    %v161 = vld [vmem:[#allocation5 + $0x14] sm:$0xf]
    %v162 = vld [vmem:[#allocation5 + $0x18] sm:$0xf]
    %v163 = vld [vmem:[#allocation5 + $0x1c] sm:$0xf]
    %v164 = vld [vmem:[%s4] sm:$0x1]
    %v166 = vlaneseq
    %v167 = vshrl.u32 %v166, 7
    %v168 = vsub.s32 0, %v167
    %v169 = vrot.slane %v164, %v168
    %v179 = vunpack.c.l.b16 %v156
    %v180 = vunpack.c.l.b16 %v157
    %v181 = vunpack.c.l.b16 %v158
    %v182 = vunpack.c.l.b16 %v159
    %v183 = vunpack.c.l.b16 %v160
    %v184 = vunpack.c.l.b16 %v161
    %v185 = vunpack.c.l.b16 %v162
    %v186 = vunpack.c.l.b16 %v163
    %v187 = vpack.c.b16 %v180, %v179
    %v188 = vpack.c.b16 %v182, %v181
    %v189 = vpack.c.b16 %v184, %v183
    %v190 = vpack.c.b16 %v186, %v185
    %vm195 = vcmask 523264
    %v197 = vsel %vm195, %v155, 0
    %199 = vmatprep.subr.bf16.mxu0 0
    %200 = vmatpush1.bf16.msra.mxu0 0
    %201 = vmatprep.subr.bf16.mxu0 0
    %202 = vmatpush1.bf16.msra.mxu0 0
    %203 = vmatprep.subr.bf16.mxu0 0
    %204 = vmatpush1.bf16.msra.mxu0 0
    %205 = vmatprep.subr.bf16.mxu0 0
    %206 = vmatpush1.bf16.msra.mxu0 0
    %207 = vmatprep.subr.bf16.mxu0 0
    %208 = vmatpush1.bf16.msra.mxu0 %v190
    %209 = vmatprep.subr.bf16.mxu0 0
    %210 = vmatpush1.bf16.msra.mxu0 %v189
    %211 = vmatprep.subr.bf16.mxu0 0
    %212 = vmatpush1.bf16.msra.mxu0 %v188
    %213 = vmatprep.subr.bf16.mxu0 0
    %214 = vmatpush1.bf16.msra.mxu0 %v187
    %215 = vmatprep.subr.bf16.mxu0 0
    %216 = vmatpush2.bf16.msra.mxu0 0
    %217 = vmatprep.subr.bf16.mxu0 0
    %218 = vmatpush2.bf16.msra.mxu0 0
    %219 = vmatprep.subr.bf16.mxu0 0
    %220 = vmatpush2.bf16.msra.mxu0 0
    %221 = vmatprep.subr.bf16.mxu0 0
    %222 = vmatpush2.bf16.msra.mxu0 0
    %223 = vmatprep.subr.bf16.mxu0 0
    %224 = vmatpush2.bf16.msra.mxu0 0
    %225 = vmatprep.subr.bf16.mxu0 0
    %226 = vmatpush2.bf16.msra.mxu0 0
    %227 = vmatprep.subr.bf16.mxu0 0
    %228 = vmatpush2.bf16.msra.mxu0 0
    %229 = vmatprep.subr.bf16.mxu0 0
    %230 = vmatpush2.bf16.msra.mxu0 0
    %231 = vmatprep.mubr.bf16.mxu0 0
    %232 = vmatmul.mubr.bf16.gmra.mxu0 %v197
    %v233 = vpop.f32.mrf.mxu0
    %v234 = vadd.f32 %v169, %v233
    %v235 = vpop.f32.mrf.mxu0
    %v236 = vpop.f32.mrf.mxu0
    %v237 = vpop.f32.mrf.mxu0
    %238 = vdwg.mxu0
    %v239 = vsel %vm195, %v234, 0.0
    %240 = vadd.xlane.f32.xlu0 %v239
    %v241 = vpop.xlane.xlu0 %240
    %v242 = vrcp.pop 64.0
    %v243 = vmul.f32 %v241, %v242
    %v244 = vsub.f32 %v234, %v243
    %v245 = vmul.f32 %v244, %v244
    %v246 = vsel %vm195, %v245, 0.0
    %247 = vadd.xlane.f32.xlu0 %v246
    %v248 = vpop.xlane.xlu0 %247
    %v249 = vmul.f32 %v248, %v242
    %v250 = vadd.f32 %v249, 1e-05
    %v251 = vrsqrt.pop %v250
    %v252 = vmul.f32 %v244, %v251
    %v253 = vld [vmem:[%s5] sm:$0x1]
    %v255 = vlaneseq
    %v256 = vshrl.u32 %v255, 7
    %v257 = vsub.s32 0, %v256
    %v258 = vrot.slane %v253, %v257
    %v260 = vmul.f32 %v252, %v258
    %v261 = vld [vmem:[%s6] sm:$0x1]
    %v263 = vlaneseq
    %v264 = vshrl.u32 %v263, 7
    %v265 = vsub.s32 0, %v264
    %v266 = vrot.slane %v261, %v265
    %v268 = vadd.f32 %v260, %v266
    %vm269 = vcmp.gt.f32.partialorder %v268, 0.0
    %v270 = vmul.f32 %v268, 0.2
    %v271 = vsel %vm269, %v268, %v270
    %v272 = vpack.c.bf16 %v271, %v271
    %v273 = vld [vmem:[#allocation7] sm:$0xf]
    %v274 = vld [vmem:[#allocation7 + $0x4] sm:$0xf]
    %v275 = vld [vmem:[#allocation7 + $0x8] sm:$0xf]
    %v276 = vld [vmem:[#allocation7 + $0xc] sm:$0xf]
    %v277 = vld [vmem:[#allocation7 + $0x10] sm:$0xf]
    %v278 = vld [vmem:[#allocation7 + $0x14] sm:$0xf]
    %v279 = vld [vmem:[#allocation7 + $0x18] sm:$0xf]
    %v280 = vld [vmem:[#allocation7 + $0x1c] sm:$0xf]
    %v281 = vld [vmem:[%s8] sm:$0x1]
    %v283 = vlaneseq
    %v284 = vshrl.u32 %v283, 7
    %v285 = vsub.s32 0, %v284
    %v286 = vrot.slane %v281, %v285
    %v296 = vunpack.c.l.b16 %v273
    %v297 = vunpack.c.l.b16 %v274
    %v298 = vunpack.c.l.b16 %v275
    %v299 = vunpack.c.l.b16 %v276
    %v300 = vunpack.c.l.b16 %v277
    %v301 = vunpack.c.l.b16 %v278
    %v302 = vunpack.c.l.b16 %v279
    %v303 = vunpack.c.l.b16 %v280
    %v304 = vpack.c.b16 %v297, %v296
    %v305 = vpack.c.b16 %v299, %v298
    %v306 = vpack.c.b16 %v301, %v300
    %v307 = vpack.c.b16 %v303, %v302
    %v313 = vsel %vm195, %v272, 0
    %315 = vmatprep.subr.bf16.mxu0 0
    %316 = vmatpush1.bf16.msra.mxu0 0
    %317 = vmatprep.subr.bf16.mxu0 0
    %318 = vmatpush1.bf16.msra.mxu0 0
    %319 = vmatprep.subr.bf16.mxu0 0
    %320 = vmatpush1.bf16.msra.mxu0 0
    %321 = vmatprep.subr.bf16.mxu0 0
    %322 = vmatpush1.bf16.msra.mxu0 0
    %323 = vmatprep.subr.bf16.mxu0 0
    %324 = vmatpush1.bf16.msra.mxu0 %v307
    %325 = vmatprep.subr.bf16.mxu0 0
    %326 = vmatpush1.bf16.msra.mxu0 %v306
    %327 = vmatprep.subr.bf16.mxu0 0
    %328 = vmatpush1.bf16.msra.mxu0 %v305
    %329 = vmatprep.subr.bf16.mxu0 0
    %330 = vmatpush1.bf16.msra.mxu0 %v304
    %331 = vmatprep.subr.bf16.mxu0 0
    %332 = vmatpush2.bf16.msra.mxu0 0
    %333 = vmatprep.subr.bf16.mxu0 0
    %334 = vmatpush2.bf16.msra.mxu0 0
    %335 = vmatprep.subr.bf16.mxu0 0
    %336 = vmatpush2.bf16.msra.mxu0 0
    %337 = vmatprep.subr.bf16.mxu0 0
    %338 = vmatpush2.bf16.msra.mxu0 0
    %339 = vmatprep.subr.bf16.mxu0 0
    %340 = vmatpush2.bf16.msra.mxu0 0
    %341 = vmatprep.subr.bf16.mxu0 0
    %342 = vmatpush2.bf16.msra.mxu0 0
    %343 = vmatprep.subr.bf16.mxu0 0
    %344 = vmatpush2.bf16.msra.mxu0 0
    %345 = vmatprep.subr.bf16.mxu0 0
    %346 = vmatpush2.bf16.msra.mxu0 0
    %347 = vmatprep.mubr.bf16.mxu0 0
    %348 = vmatmul.mubr.bf16.gmra.mxu0 %v313
    %v349 = vpop.f32.mrf.mxu0
    %v350 = vadd.f32 %v286, %v349
    %v351 = vpop.f32.mrf.mxu0
    %v352 = vpop.f32.mrf.mxu0
    %v353 = vpop.f32.mrf.mxu0
    %354 = vdwg.mxu0
    %355 = vst [vmem:[#allocation8] sm:$0xff] %v350
    // Predicated region
    $region50: #{tpu_custom_call.1} parent=1 // pred_check
      _
    $region51: #{tpu_custom_call.1} parent=1 // pred_check_branch
      %357 = sbr.rel (0) target = $region53
    $region52: #{tpu_custom_call.1} parent=1 // pred_region
      %s359 = ssub.s32 128, 128
      %360 = vsyncadd [#allocation4], %s359
      %s362 = sshll.u32 [#allocation8], 4
      %s363 = int_to_ptr.vmem [resolvable:$true] %s362
      %365 = dma.vmem_to_hbm [thread:$0]  %s363, 128, %s9, [#allocation4]
    $region53: #{tpu_custom_call.1} parent=1 // pred_fallthru
      _
    // Predicated region
    $region54: #{tpu_custom_call.1} parent=1 // pred_check
      _
    $region55: #{tpu_custom_call.1} parent=1 // pred_check_branch
      %367 = sbr.rel (0) target = $region57
    $region56: #{tpu_custom_call.1} parent=1 // pred_region
      %368 = dma.done [#allocation4], 128
    $region57: #{tpu_custom_call.1} parent=1 // pred_fallthru
      _
    %369 = vsyncpa [#allocation3], 1
    %370 = vsyncpa [#allocation6], 1
    %371 = vsyncpa [#allocation4], 1

</llo_original>
